<compile_context>
chip_gen: v6e
topology: v6e:2x2x1
jax: 0.10.0
libtpu: 0.0.40
codegen_flags: <defaults>
</compile_context>

<pallas_src>
import functools

import jax
import jax.numpy as jnp
from jax import lax
from jax.experimental import pallas as pl
from jax.experimental.pallas import tpu as pltpu

_EPS = 1e-7
_LANES = 128
_DEFAULT_TILE_BYTES = 3 * 1024 * 1024  # per input, per pipeline buffer


def _cdiv(a, b):
    return -(-a // b)


def _prop_loss_kernel(yp_ref, yt_ref, o_ref, acc_ref, *,
                      total_rows, tile_rows, lane_width, fold_rows,
                      steps, needs_mask):
    # Zero the (per-core) accumulator at the start of each reduction sweep.
    @pl.when(pl.program_id(1) == 0)
    def _():
        acc_ref[...] = jnp.zeros_like(acc_ref)

    yp = yp_ref[...].astype(jnp.float32)
    yt = yt_ref[...].astype(jnp.float32)
    diff = yp - yt
    w = jnp.abs(yt) + _EPS
    # EUP approx reciprocal + one Newton-Raphson refinement: relative error
    # ~1e-7 (vs ~2e-4 raw), independent of |y_true| magnitude, and the
    # transcendental lands on the EUP slot instead of the VALU critical path.
    inv = pl.reciprocal(w, approx=True)
    inv = inv * (2.0 - w * inv)
    val = (diff * diff) * inv  # MSE(reduction='none') / (|y_true| + eps)

    def fold_into_acc(v):
        # Fold the tile onto the vreg-shaped accumulator (pure VPU adds).
        if tile_rows == fold_rows:
            acc_ref[...] += v
        else:
            acc_ref[...] += jnp.sum(
                v.reshape(tile_rows // fold_rows, fold_rows, lane_width), axis=0)

    if needs_mask:
        # Logical (unclamped) block id for this step -> global row range.
        blk = pl.program_id(0) * steps + pl.program_id(1)
        is_full = (blk + 1) * tile_rows <= total_rows

        @pl.when(is_full)
        def _():
            fold_into_acc(val)

        @pl.when(jnp.logical_not(is_full))
        def _():
            row_ids = blk * tile_rows + lax.broadcasted_iota(
                jnp.int32, (tile_rows, lane_width), 0)
            fold_into_acc(jnp.where(row_ids < total_rows, val, 0.0))
    else:
        fold_into_acc(val)

    # Single cross-lane/cross-sublane reduce, once, at the end of the sweep.
    @pl.when(pl.program_id(1) == pl.num_programs(1) - 1)
    def _():
        o_ref[...] = jnp.sum(acc_ref[...]).reshape(1, 1, 1)


def proportional_loss(y_pred, y_true, *, target_tile_bytes=_DEFAULT_TILE_BYTES):
    assert y_pred.shape == y_true.shape
    total_n = int(y_pred.size)
    itemsize = jnp.dtype(y_pred.dtype).itemsize

    # Flatten (free reshape of contiguous inputs) -- keep native dtype.
    yp = jnp.ravel(y_pred)
    yt = jnp.ravel(y_true)

    # Lane width: largest multiple of 128 (from a small menu) dividing the
    # element count. Only if nothing divides do we pay for a padding copy
    # (padded positions have y_pred == y_true == 0 -> contribute 0).
    lane_width = None
    for w in (2048, 1024, 512, 256, 128):
        if total_n % w == 0:
            lane_width = w
            break
    if lane_width is None:
        lane_width = _LANES
        padded = _cdiv(total_n, lane_width) * lane_width
        yp = jnp.pad(yp, (0, padded - total_n))
        yt = jnp.pad(yt, (0, padded - total_n))

    rows = yp.size // lane_width
    yp2 = yp.reshape(rows, lane_width)
    yt2 = yt.reshape(rows, lane_width)

    # Row-block size: as many rows as fit the per-buffer budget, aligned to
    # the sublane packing of the input dtype (8 for 4B, 16 for 2B, 32 for 1B).
    row_align = max(8, 32 // itemsize)
    max_tile_rows = max(1, target_tile_bytes // (lane_width * itemsize))
    if rows <= max_tile_rows:
        tile_rows = rows                              # one block == full extent
    else:
        tile_rows = max(row_align, (max_tile_rows // row_align) * row_align)
    fold_rows = 8 if tile_rows % 8 == 0 else tile_rows

    num_blocks = _cdiv(rows, tile_rows)
    num_splits = 2 if num_blocks >= 2 else 1          # both TensorCores on v7x
    steps = _cdiv(num_blocks, num_splits)
    needs_mask = (rows % tile_rows != 0) or (num_splits * steps != num_blocks)
    last_block = num_blocks - 1

    def in_index_map(c, i):
        # Clamp so steps past the end re-read the last block (masked to zero).
        return (jnp.minimum(c * steps + i, last_block), 0)

    kernel = functools.partial(
        _prop_loss_kernel,
        total_rows=rows, tile_rows=tile_rows, lane_width=lane_width,
        fold_rows=fold_rows, steps=steps, needs_mask=needs_mask)

    partial_sums = pl.pallas_call(
        kernel,
        out_shape=jax.ShapeDtypeStruct((num_splits, 1, 1), jnp.float32),
        grid_spec=pltpu.PrefetchScalarGridSpec(
            num_scalar_prefetch=0,
            grid=(num_splits, steps),
            in_specs=[
                pl.BlockSpec((tile_rows, lane_width), in_index_map),
                pl.BlockSpec((tile_rows, lane_width), in_index_map),
            ],
            out_specs=pl.BlockSpec((1, 1, 1), lambda c, i: (c, 0, 0)),
            scratch_shapes=[pltpu.VMEM((fold_rows, lane_width), jnp.float32)],
        ),
        compiler_params=pltpu.CompilerParams(
            dimension_semantics=("parallel", "arbitrary")),
    )(yp2, yt2)

    return jnp.sum(partial_sums) / jnp.float32(total_n)


def _reference(y_pred, y_true):
    y_pred = y_pred.astype(jnp.float32)
    y_true = y_true.astype(jnp.float32)
    base = (y_pred - y_true) ** 2
    weights = jnp.abs(y_true)
    return jnp.mean(base / (weights + _EPS))


if __name__ == "__main__":
    key = jax.random.PRNGKey(0)

    # Primary case: NCHW-shaped inputs like the PyTorch caller.
    k1, k2, k3, k4, k5, k6 = jax.random.split(key, 6)
    x_shape = (2, 4, 16, 16)
    y_pred = jax.random.normal(k1, x_shape, dtype=jnp.float32)
    y_true = jax.random.normal(k2, x_shape, dtype=jnp.float32)
    loss = proportional_loss(y_pred, y_true)
    jax.block_until_ready(loss)
    ref = _reference(y_pred, y_true)
    assert jnp.allclose(loss, ref, rtol=1e-4, atol=1e-6), (loss, ref)

    # Extra check: size not a multiple of 128 (exercises the tail-pad path).
    a = jax.random.normal(k3, (3, 5, 7, 11), dtype=jnp.float32)
    b = jax.random.normal(k4, (3, 5, 7, 11), dtype=jnp.float32)
    loss2 = proportional_loss(a, b)
    assert jnp.allclose(loss2, _reference(a, b), rtol=1e-4, atol=1e-6)

    # Extra check: force tiny tiles so the multi-block / dual-split / partial
    # edge-block masking and clamped index path are exercised.
    c = jax.random.normal(k5, (41, 128), dtype=jnp.float32)
    d = jax.random.normal(k6, (41, 128), dtype=jnp.float32)
    loss3 = proportional_loss(c, d, target_tile_bytes=8192)
    assert jnp.allclose(loss3, _reference(c, d), rtol=1e-4, atol=1e-6)

    print("KERNEL_OK")
</pallas_src>

<mosaic_0001>
module attributes {stable_mosaic.version = 11 : i64} {
  func.func @_prop_loss_kernel(%arg0: i32, %arg1: i32, %arg2: memref<1x2048xf32, #tpu.memory_space<vmem>>, %arg3: memref<1x2048xf32, #tpu.memory_space<vmem>>, %arg4: memref<1x1x1xf32, #tpu.memory_space<vmem>>, %arg5: memref<1x2048xf32, #tpu.memory_space<vmem>>) attributes {dimension_semantics = [#tpu.dimension_semantics<parallel>, #tpu.dimension_semantics<arbitrary>], iteration_bounds = array<i64: 1, 1>, scalar_prefetch = 0 : i64, scratch_operands = 1 : i64, tpu.core_type = #tpu.core_type<tc>, window_params = [{transform_indices = @transform_0, window_bounds = array<i64: 1, 2048>}, {transform_indices = @transform_1, window_bounds = array<i64: 1, 2048>}, {transform_indices = @transform_2, window_bounds = array<i64: 1, 1, 1>}]} {
    %c0_i32 = arith.constant 0 : i32
    %0 = arith.cmpi eq, %arg1, %c0_i32 : i32
    %1 = arith.extui %0 : i1 to i32
    %c0_i32_0 = arith.constant 0 : i32
    %2 = arith.cmpi ne, %1, %c0_i32_0 : i32
    scf.if %2 {
      %cst_11 = arith.constant 0.000000e+00 : f32
      %22 = vector.broadcast %cst_11 : f32 to vector<1x2048xf32>
      %c0_12 = arith.constant 0 : index
      %c0_13 = arith.constant 0 : index
      %23 = vector.load %arg5[%c0_12, %c0_13] : memref<1x2048xf32, #tpu.memory_space<vmem>>, vector<1x2048xf32>
      tpu.vector_store %arg5[%c0_12, %c0_13], %22 {strides = array<i32>} : memref<1x2048xf32, #tpu.memory_space<vmem>>, vector<1x2048xf32>,
    } else {
    }
    %c0 = arith.constant 0 : index
    %c0_1 = arith.constant 0 : index
    %3 = vector.load %arg2[%c0, %c0_1] : memref<1x2048xf32, #tpu.memory_space<vmem>>, vector<1x2048xf32>
    %c0_2 = arith.constant 0 : index
    %c0_3 = arith.constant 0 : index
    %4 = vector.load %arg3[%c0_2, %c0_3] : memref<1x2048xf32, #tpu.memory_space<vmem>>, vector<1x2048xf32>
    %5 = arith.subf %3, %4 : vector<1x2048xf32>
    %6 = math.absf %4 : vector<1x2048xf32>
    %cst = arith.constant 1.000000e-07 : f32
    %7 = vector.broadcast %cst : f32 to vector<1x2048xf32>
    %8 = arith.addf %6, %7 : vector<1x2048xf32>
    %9 = tpu.reciprocal %8 {approx = true} : vector<1x2048xf32> -> vector<1x2048xf32>
    %10 = arith.mulf %8, %9 : vector<1x2048xf32>
    %cst_4 = arith.constant 2.000000e+00 : f32
    %11 = vector.broadcast %cst_4 : f32 to vector<1x2048xf32>
    %12 = arith.subf %11, %10 : vector<1x2048xf32>
    %13 = arith.mulf %9, %12 : vector<1x2048xf32>
    %14 = arith.mulf %5, %5 : vector<1x2048xf32>
    %15 = arith.mulf %14, %13 : vector<1x2048xf32>
    %c0_5 = arith.constant 0 : index
    %c0_6 = arith.constant 0 : index
    %16 = vector.load %arg5[%c0_5, %c0_6] : memref<1x2048xf32, #tpu.memory_space<vmem>>, vector<1x2048xf32>
    %17 = arith.addf %16, %15 : vector<1x2048xf32>
    %c0_7 = arith.constant 0 : index
    %c0_8 = arith.constant 0 : index
    %18 = vector.load %arg5[%c0_7, %c0_8] : memref<1x2048xf32, #tpu.memory_space<vmem>>, vector<1x2048xf32>
    tpu.vector_store %arg5[%c0_7, %c0_8], %17 {strides = array<i32>} : memref<1x2048xf32, #tpu.memory_space<vmem>>, vector<1x2048xf32>,
    %c0_i32_9 = arith.constant 0 : i32
    %19 = arith.cmpi eq, %arg1, %c0_i32_9 : i32
    %20 = arith.extui %19 : i1 to i32
    %c0_i32_10 = arith.constant 0 : i32
    %21 = arith.cmpi ne, %20, %c0_i32_10 : i32
    scf.if %21 {
      %c0_11 = arith.constant 0 : index
      %c0_12 = arith.constant 0 : index
      %22 = vector.load %arg5[%c0_11, %c0_12] : memref<1x2048xf32, #tpu.memory_space<vmem>>, vector<1x2048xf32>
      %23 = vector.shape_cast %22 : vector<1x2048xf32> to vector<1x1x2048xf32>
      %cst_13 = arith.constant dense<0.000000e+00> : vector<1xf32>
      %24 = vector.multi_reduction <add>, %23, %cst_13 [1, 2] : vector<1x1x2048xf32> to vector<1xf32>
      %25 = vector.shape_cast %24 : vector<1xf32> to vector<1x1x1xf32>
      %26 = vector.extract %25[0, 0, 0] : f32 from vector<1x1x1xf32>
      %27 = vector.broadcast %26 : f32 to vector<1x1x1xf32>
      %c0_14 = arith.constant 0 : index
      %c0_15 = arith.constant 0 : index
      %c0_16 = arith.constant 0 : index
      %28 = vector.load %arg4[%c0_14, %c0_15, %c0_16] : memref<1x1x1xf32, #tpu.memory_space<vmem>>, vector<1x1x1xf32>
      tpu.vector_store %arg4[%c0_14, %c0_15, %c0_16], %27 {strides = array<i32>} : memref<1x1x1xf32, #tpu.memory_space<vmem>>, vector<1x1x1xf32>,
    } else {
    }
    return
  }
  func.func @transform_0(%arg0: i32, %arg1: i32) -> (i32, i32) {
    %c1_i32 = arith.constant 1 : i32
    %0 = arith.muli %arg0, %c1_i32 : i32
    %1 = arith.addi %0, %arg1 : i32
    %c0_i32 = arith.constant 0 : i32
    %2 = arith.minsi %1, %c0_i32 : i32
    %c0_i32_0 = arith.constant 0 : i32
    %c0_i32_1 = arith.constant 0 : i32
    return %2, %c0_i32_0 : i32, i32
  }
  func.func @transform_1(%arg0: i32, %arg1: i32) -> (i32, i32) {
    %c1_i32 = arith.constant 1 : i32
    %0 = arith.muli %arg0, %c1_i32 : i32
    %1 = arith.addi %0, %arg1 : i32
    %c0_i32 = arith.constant 0 : i32
    %2 = arith.minsi %1, %c0_i32 : i32
    %c0_i32_0 = arith.constant 0 : i32
    %c0_i32_1 = arith.constant 0 : i32
    return %2, %c0_i32_0 : i32, i32
  }
  func.func @transform_2(%arg0: i32, %arg1: i32) -> (i32, i32, i32) {
    %c0_i32 = arith.constant 0 : i32
    %c0_i32_0 = arith.constant 0 : i32
    %c0_i32_1 = arith.constant 0 : i32
    return %arg0, %c0_i32, %c0_i32_0 : i32, i32, i32
  }
}

</mosaic_0001>

<llo_original>
// kernel: tpu_custom_call.1
$region0: #{tpu_custom_call.1}
  #allocation0 [shape = 'u32[]', space=smem, size = 0x4, offset = 0x4, fixed_abs, tag = 'smem constant byte address 0x4 - core index']
  #allocation1 [shape = 'u32[144,128]{1,0:T(1,128)}', space=vmem, size = 0x12000, scoped, tag = 'internal scratch']
  #allocation2 [shape = 'f32[1,2048]{1,0:T(1,128)}', space=vmem, size = 0x2000, scoped, tag = 'scratch operand']
  %s0 = inlined_call_operand.hbm [shape: f32[1,2048], index: 0, kind: input, shape index: {}]
  %s1 = inlined_call_operand.hbm [shape: f32[1,2048], index: 1, kind: input, shape index: {}]
  %s2 = inlined_call_operand.hbm [shape: f32[1,1,1], index: 2, kind: output, shape index: {}]
  %s3 = sld [smem:[#allocation0]]
  $region34: #{tpu_custom_call.1} parent=0
    _
  %s5 = ssub.s32 1, %s3
  %s6 = scalar_select 0, %s5, %s3
  $region1: #{tpu_custom_call.1} parent=0
    #allocation3 [shape = 'u8[8192]{0}', space=vmem, size = 0x2000, scoped, tag = 'input window, operand 0, single buffered']
    #allocation4 [shape = 's32[1]{0}', space=sflag, size = 0x4, scoped, tag = 'scoped memory for tpu_custom_call.1']
    #allocation5 [shape = 's32[1]{0}', space=sflag, size = 0x4, scoped, tag = 'scoped memory for tpu_custom_call.1']
    #allocation6 [shape = 'u8[8192]{0}', space=vmem, size = 0x2000, scoped, tag = 'input window, operand 1, single buffered']
    #allocation7 [shape = 's32[1]{0}', space=sflag, size = 0x4, scoped, tag = 'scoped memory for tpu_custom_call.1']
    #allocation8 [shape = 'u8[512]{0}', space=vmem, size = 0x400, scoped, tag = 'output window, operand 0, single buffered']
    %7 = vsyncpa [#allocation4], 0
    %8 = vsyncpa [#allocation7], 0
    %9 = vsyncpa [#allocation5], 0
    // Predicated region
    $region2: #{tpu_custom_call.1} parent=1 // pred_check
      _
    $region3: #{tpu_custom_call.1} parent=1 // pred_check_branch
      %11 = sbr.rel (0) target = $region5
    $region4: #{tpu_custom_call.1} parent=1 // pred_region
      %s12 = sadd.s32 0, 0
      %p13 = scmp.lt.s32.totalorder %s12, 0
      %s14 = scalar_select %p13, %s12, 0
      %s16 = ssub.s32 256, 256
      %17 = vsyncadd [#allocation4], %s16
      %s18 = smul.addr %s14, 16
      %s19 = smul.addr %s18, 16
      %s20 = scalar_lea.hbm %s0, %s19
      %s22 = sshll.u32 [#allocation3], 4
      %s23 = int_to_ptr.vmem [resolvable:$true] %s22
      %25 = dma.hbm_to_vmem [thread:$0]  %s20, 256, %s23, [#allocation4]
    $region5: #{tpu_custom_call.1} parent=1 // pred_fallthru
      _
    // Predicated region
    $region6: #{tpu_custom_call.1} parent=1 // pred_check
      _
    $region7: #{tpu_custom_call.1} parent=1 // pred_check_branch
      %27 = sbr.rel (0) target = $region9
    $region8: #{tpu_custom_call.1} parent=1 // pred_region
      %s28 = sadd.s32 0, 0
      %p29 = scmp.lt.s32.totalorder %s28, 0
      %s30 = scalar_select %p29, %s28, 0
      %s32 = ssub.s32 256, 256
      %33 = vsyncadd [#allocation7], %s32
      %s34 = smul.addr %s30, 16
      %s35 = smul.addr %s34, 16
      %s36 = scalar_lea.hbm %s1, %s35
      %s38 = sshll.u32 [#allocation6], 4
      %s39 = int_to_ptr.vmem [resolvable:$true] %s38
      %41 = dma.hbm_to_vmem [thread:$0]  %s36, 256, %s39, [#allocation7]
    $region9: #{tpu_custom_call.1} parent=1 // pred_fallthru
      _
    // Predicated region
    $region10: #{tpu_custom_call.1} parent=1 // pred_check
      _
    $region11: #{tpu_custom_call.1} parent=1 // pred_check_branch
      %43 = sbr.rel (0) target = $region13
    $region12: #{tpu_custom_call.1} parent=1 // pred_region
      %44 = dma.done [#allocation4], 256
    $region13: #{tpu_custom_call.1} parent=1 // pred_fallthru
      _
    // Predicated region
    $region14: #{tpu_custom_call.1} parent=1 // pred_check
      _
    $region15: #{tpu_custom_call.1} parent=1 // pred_check_branch
      %46 = sbr.rel (0) target = $region17
    $region16: #{tpu_custom_call.1} parent=1 // pred_region
      %47 = dma.done [#allocation7], 256
    $region17: #{tpu_custom_call.1} parent=1 // pred_fallthru
      _
    %s48 = sadd.s32 0, 0
    %p49 = scmp.lt.s32.totalorder %s48, 0
    %s50 = scalar_select %p49, %s48, 0
    %s51 = sadd.s32 0, 0
    %p52 = scmp.lt.s32.totalorder %s51, 0
    %s53 = scalar_select %p52, %s51, 0
    %p54 = scmp.eq.s32.totalorder 0, 0
    // Predicated region
    $region18: #{tpu_custom_call.1} parent=1 // pred_check
      %p55 = pneg %p54
    $region19: #{tpu_custom_call.1} parent=1 // pred_check_branch
      %57 = sbr.rel (%p55) target = $region21
    $region20: #{tpu_custom_call.1} parent=1 // pred_region
      %58 = vst [vmem:[#allocation2] sm:$0xff] 0.0
      %59 = vst [vmem:[#allocation2 + $0x8] sm:$0xff] 0.0
    $region21: #{tpu_custom_call.1} parent=1 // pred_fallthru
      _
    %v60 = vld [vmem:[#allocation3] sm:$0xff]
    %v61 = vld [vmem:[#allocation3 + $0x8] sm:$0xff]
    %v62 = vld [vmem:[#allocation6] sm:$0xff]
    %v63 = vld [vmem:[#allocation6 + $0x8] sm:$0xff]
    %v64 = vsub.f32 %v60, %v62
    %v65 = vsub.f32 %v61, %v63
    %v66 = vand.u32 2147483647, %v62
    %v67 = vand.u32 2147483647, %v63
    %v68 = vadd.f32 %v66, 1e-07
    %v69 = vadd.f32 %v67, 1e-07
    %v70 = vrcp.pop %v68
    %v71 = vrcp.pop %v69
    %v72 = vmul.f32 %v68, %v70
    %v73 = vmul.f32 %v69, %v71
    %v74 = vsub.f32 2.0, %v72
    %v75 = vsub.f32 2.0, %v73
    %v76 = vmul.f32 %v70, %v74
    %v77 = vmul.f32 %v71, %v75
    %v78 = vmul.f32 %v64, %v64
    %v79 = vmul.f32 %v65, %v65
    %v80 = vmul.f32 %v78, %v76
    %v81 = vmul.f32 %v79, %v77
    %v82 = vld [vmem:[#allocation2] sm:$0xff]
    %v83 = vld [vmem:[#allocation2 + $0x8] sm:$0xff]
    %v84 = vadd.f32 %v82, %v80
    %v85 = vadd.f32 %v83, %v81
    %86 = vst [vmem:[#allocation2] sm:$0xff] %v84
    %87 = vst [vmem:[#allocation2 + $0x8] sm:$0xff] %v85
    // Predicated region
    $region22: #{tpu_custom_call.1} parent=1 // pred_check
      %p88 = pneg %p54
    $region23: #{tpu_custom_call.1} parent=1 // pred_check_branch
      %90 = sbr.rel (%p88) target = $region25
    $region24: #{tpu_custom_call.1} parent=1 // pred_region
      %v91 = vld [vmem:[#allocation2] sm:$0xff]
      %v92 = vld [vmem:[#allocation2 + $0x8] sm:$0xff]
      %v95 = vlaneseq
      %v96 = vshrl.u32 %v95, 7
      %v97 = vsub.s32 0, %v96
      %v98 = vrot.slane %v91, %v97
      %v99 = vlaneseq
      %v100 = vshrl.u32 %v99, 7
      %v101 = vsub.s32 1, %v100
      %v102 = vrot.slane %v91, %v101
      %v103 = vlaneseq
      %v104 = vshrl.u32 %v103, 7
      %v105 = vsub.s32 2, %v104
      %v106 = vrot.slane %v91, %v105
      %v107 = vlaneseq
      %v108 = vshrl.u32 %v107, 7
      %v109 = vsub.s32 3, %v108
      %v110 = vrot.slane %v91, %v109
      %v111 = vlaneseq
      %v112 = vshrl.u32 %v111, 7
      %v113 = vsub.s32 4, %v112
      %v114 = vrot.slane %v91, %v113
      %v115 = vlaneseq
      %v116 = vshrl.u32 %v115, 7
      %v117 = vsub.s32 5, %v116
      %v118 = vrot.slane %v91, %v117
      %v119 = vlaneseq
      %v120 = vshrl.u32 %v119, 7
      %v121 = vsub.s32 6, %v120
      %v122 = vrot.slane %v91, %v121
      %v123 = vlaneseq
      %v124 = vshrl.u32 %v123, 7
      %v125 = vsub.s32 7, %v124
      %v126 = vrot.slane %v91, %v125
      %v127 = vlaneseq
      %v128 = vshrl.u32 %v127, 7
      %v129 = vsub.s32 0, %v128
      %v130 = vrot.slane %v92, %v129
      %v131 = vlaneseq
      %v132 = vshrl.u32 %v131, 7
      %v133 = vsub.s32 1, %v132
      %v134 = vrot.slane %v92, %v133
      %v135 = vlaneseq
      %v136 = vshrl.u32 %v135, 7
      %v137 = vsub.s32 2, %v136
      %v138 = vrot.slane %v92, %v137
      %v139 = vlaneseq
      %v140 = vshrl.u32 %v139, 7
      %v141 = vsub.s32 3, %v140
      %v142 = vrot.slane %v92, %v141
      %v143 = vlaneseq
      %v144 = vshrl.u32 %v143, 7
      %v145 = vsub.s32 4, %v144
      %v146 = vrot.slane %v92, %v145
      %v147 = vlaneseq
      %v148 = vshrl.u32 %v147, 7
      %v149 = vsub.s32 5, %v148
      %v150 = vrot.slane %v92, %v149
      %v151 = vlaneseq
      %v152 = vshrl.u32 %v151, 7
      %v153 = vsub.s32 6, %v152
      %v154 = vrot.slane %v92, %v153
      %v155 = vlaneseq
      %v156 = vshrl.u32 %v155, 7
      %v157 = vsub.s32 7, %v156
      %v158 = vrot.slane %v92, %v157
      %vm175 = vcmask 1040384
      %v176 = vsel %vm175, %v98, 0.0
      %v177 = vsel %vm175, %v102, 0.0
      %v178 = vadd.f32 %v176, %v177
      %v179 = vsel %vm175, %v106, 0.0
      %v180 = vadd.f32 %v178, %v179
      %v181 = vsel %vm175, %v110, 0.0
      %v182 = vadd.f32 %v180, %v181
      %v183 = vsel %vm175, %v114, 0.0
      %v184 = vadd.f32 %v182, %v183
      %v185 = vsel %vm175, %v118, 0.0
      %v186 = vadd.f32 %v184, %v185
      %v187 = vsel %vm175, %v122, 0.0
      %v188 = vadd.f32 %v186, %v187
      %v189 = vsel %vm175, %v126, 0.0
      %v190 = vadd.f32 %v188, %v189
      %v191 = vsel %vm175, %v130, 0.0
      %v192 = vadd.f32 %v190, %v191
      %v193 = vsel %vm175, %v134, 0.0
      %v194 = vadd.f32 %v192, %v193
      %v195 = vsel %vm175, %v138, 0.0
      %v196 = vadd.f32 %v194, %v195
      %v197 = vsel %vm175, %v142, 0.0
      %v198 = vadd.f32 %v196, %v197
      %v199 = vsel %vm175, %v146, 0.0
      %v200 = vadd.f32 %v198, %v199
      %v201 = vsel %vm175, %v150, 0.0
      %v202 = vadd.f32 %v200, %v201
      %v203 = vsel %vm175, %v154, 0.0
      %v204 = vadd.f32 %v202, %v203
      %v205 = vsel %vm175, %v158, 0.0
      %v206 = vadd.f32 %v204, %v205
      %207 = vadd.xlane.f32.xlu0 %v206
      %v208 = vpop.xlane.xlu0 %207
      %v209 = vrot.slane %v208, 4
      %v210 = vadd.f32 %v208, %v209
      %v211 = vrot.slane %v210, 2
      %v212 = vadd.f32 %v210, %v211
      %v213 = vrot.slane %v212, 1
      %v214 = vadd.f32 %v212, %v213
      %s215 = vtos %v214
      %v216 = vstv %s215
      %vm217 = vcmask 0
      %218 = vst.msk [vmem:[#allocation8] sm:$0x1] %vm217, %v216
    $region25: #{tpu_custom_call.1} parent=1 // pred_fallthru
      _
    // Predicated region
    $region26: #{tpu_custom_call.1} parent=1 // pred_check
      _
    $region27: #{tpu_custom_call.1} parent=1 // pred_check_branch
      %220 = sbr.rel (0) target = $region29
    $region28: #{tpu_custom_call.1} parent=1 // pred_region
      %s222 = ssub.s32 16, 16
      %223 = vsyncadd [#allocation5], %s222
      %s225 = sshll.u32 [#allocation8], 4
      %s226 = int_to_ptr.vmem [resolvable:$true] %s225
      %228 = dma.vmem_to_hbm [thread:$0]  %s226, 16, %s2, [#allocation5]
    $region29: #{tpu_custom_call.1} parent=1 // pred_fallthru
      _
    // Predicated region
    $region30: #{tpu_custom_call.1} parent=1 // pred_check
      _
    $region31: #{tpu_custom_call.1} parent=1 // pred_check_branch
      %230 = sbr.rel (0) target = $region33
    $region32: #{tpu_custom_call.1} parent=1 // pred_region
      %231 = dma.done [#allocation5], 16
    $region33: #{tpu_custom_call.1} parent=1 // pred_fallthru
      _
    %232 = vsyncpa [#allocation4], 1
    %233 = vsyncpa [#allocation7], 1
    %234 = vsyncpa [#allocation5], 1

</llo_original>
